<compile_context>
chip_gen: v6e
topology: v6e:2x2x1
jax: 0.10.0
libtpu: 0.0.40
codegen_flags: <defaults>
</compile_context>

<pallas_src>
import jax
import jax.numpy as jnp
from jax.experimental import pallas as pl
from jax.experimental.pallas import tpu as pltpu


def _make_kernel(temperature: float):
    inv_t = 1.0 / float(temperature)
    eps = 1e-12            # F.normalize default eps
    eps_sq = eps * eps     # fits comfortably in f32 (>> min normal)

    def kernel(anchor_ref, positive_ref, negatives_ref, out_ref):
        a = anchor_ref[...].astype(jnp.float32)      # (TB, F)
        p = positive_ref[...].astype(jnp.float32)    # (TB, F)

        # L2-normalize anchor / positive once per B-tile.
        # x * rsqrt(max(||x||^2, eps^2)) == x / max(||x||, eps)  (F.normalize).
        a_n = a * jax.lax.rsqrt(
            jnp.maximum(jnp.sum(a * a, axis=-1, keepdims=True), eps_sq))
        p_n = p * jax.lax.rsqrt(
            jnp.maximum(jnp.sum(p * p, axis=-1, keepdims=True), eps_sq))

        pos_sim = jnp.sum(a_n * p_n, axis=-1, keepdims=True)      # (TB, 1)

        # Negatives tile: contract over F and accumulate ||n||^2 in the same
        # streamed pass, then scale the (TB, N) similarities (identical to
        # normalize-then-dot without a (TB, N, F) divide pass).
        n = negatives_ref[...].astype(jnp.float32)                 # (TB, N, F)
        neg_dot = jnp.sum(a_n[:, None, :] * n, axis=-1)            # (TB, N)
        neg_sq = jnp.sum(n * n, axis=-1)                           # (TB, N)
        neg_sim = neg_dot * jax.lax.rsqrt(jnp.maximum(neg_sq, eps_sq))

        pos_l = pos_sim * inv_t                                    # (TB, 1)
        neg_l = neg_sim * inv_t                                    # (TB, N)

        # cross_entropy with target class 0 (the positive logit):
        #   loss_b = logsumexp([pos_l_b, neg_l_b...]) - pos_l_b
        m = jnp.maximum(pos_l, jnp.max(neg_l, axis=-1, keepdims=True))    # (TB, 1)
        lse = m + jnp.log(jnp.exp(pos_l - m)
                          + jnp.sum(jnp.exp(neg_l - m), axis=-1, keepdims=True))
        out_ref[...] = (lse - pos_l).astype(out_ref.dtype)          # (TB, 1)

    return kernel


def _round_up(x: int, m: int) -> int:
    return ((x + m - 1) // m) * m


def _pick_batch_tile(B: int, N: int, F: int, itemsize: int) -> int:
    """Largest batch tile whose *physical* VMEM footprint stays in budget."""
    # Mosaic pads the minor two dims of each VMEM block to (8, 128), so small
    # N / F inflate the real footprint beyond N*F*itemsize.
    n_pad = _round_up(max(N, 1), 8)
    f_pad = _round_up(max(F, 1), 128)
    # Per batch row:
    #   negatives: 2 pipeline buffers (input dtype) + ~2 f32 in-kernel temps
    #   anchor/positive: 2 arrays x 2 buffers (input dtype) + f32 normalized copies
    bytes_per_row = (n_pad * f_pad * (2 * itemsize + 2 * 4)
                     + f_pad * (4 * itemsize + 2 * 4))
    budget = 12 * 1024 * 1024          # headroom inside the 32 MiB scoped VMEM
    cap = max(8, budget // max(1, bytes_per_row))
    upper = min(cap, _round_up(B, 8))
    for tb in (1024, 512, 256, 128, 64, 32, 16, 8):
        if tb <= upper:
            return tb
    return 8


def contrastive_loss(anchor, positive, negatives, temperature):
    """anchor: (B, F), positive: (B, F), negatives: (B, N, F) -> scalar f32 loss."""
    B, F = anchor.shape
    _, N, _ = negatives.shape

    TB = _pick_batch_tile(B, N, F, jnp.dtype(negatives.dtype).itemsize)
    B_pad = _round_up(B, TB)
    if B_pad != B:
        pad = B_pad - B
        anchor = jnp.pad(anchor, ((0, pad), (0, 0)))
        positive = jnp.pad(positive, ((0, pad), (0, 0)))
        negatives = jnp.pad(negatives, ((0, pad), (0, 0), (0, 0)))

    kernel = _make_kernel(temperature)

    per_example = pl.pallas_call(
        kernel,
        out_shape=jax.ShapeDtypeStruct((B_pad, 1), jnp.float32),
        grid=(B_pad // TB,),
        in_specs=[
            pl.BlockSpec((TB, F), lambda i: (i, 0)),
            pl.BlockSpec((TB, F), lambda i: (i, 0)),
            pl.BlockSpec((TB, N, F), lambda i: (i, 0, 0)),
        ],
        out_specs=pl.BlockSpec((TB, 1), lambda i: (i, 0)),
        compiler_params=pltpu.CompilerParams(
            dimension_semantics=("parallel",),
            vmem_limit_bytes=32 * 1024 * 1024,
        ),
    )(anchor, positive, negatives)

    # Mean over the TRUE batch size; padded rows are dropped here.
    return jnp.sum(per_example[:B, 0]) / B


def _reference_loss(anchor, positive, negatives, temperature):
    """Pure-JAX reference mirroring the PyTorch module."""
    eps = 1e-12
    a = anchor / jnp.maximum(jnp.linalg.norm(anchor, axis=1, keepdims=True), eps)
    p = positive / jnp.maximum(jnp.linalg.norm(positive, axis=1, keepdims=True), eps)
    n = negatives / jnp.maximum(jnp.linalg.norm(negatives, axis=2, keepdims=True), eps)
    pos_sim = jnp.sum(a * p, axis=1, keepdims=True)
    neg_sim = jnp.einsum('bf,bnf->bn', a, n)
    logits = jnp.concatenate([pos_sim, neg_sim], axis=1) / temperature
    lse = jax.scipy.special.logsumexp(logits, axis=1)
    return jnp.mean(lse - logits[:, 0])


if __name__ == "__main__":
    key = jax.random.PRNGKey(0)
    k1, k2, k3 = jax.random.split(key, 3)

    B, N, F = 2, 5, 32
    temperature = 0.5

    anchor = jax.random.normal(k1, (B, F), dtype=jnp.float32)
    positive = jax.random.normal(k2, (B, F), dtype=jnp.float32)
    negatives = jax.random.normal(k3, (B, N, F), dtype=jnp.float32)

    loss = contrastive_loss(anchor, positive, negatives, temperature)
    loss = jax.block_until_ready(loss)

    ref = _reference_loss(anchor, positive, negatives, temperature)
    assert jnp.allclose(loss, ref, rtol=1e-4, atol=1e-5), (loss, ref)

    print("KERNEL_OK")
</pallas_src>

<mosaic_0001>
module attributes {stable_mosaic.version = 11 : i64} {
  func.func @kernel(%arg0: i32, %arg1: memref<8x32xf32, #tpu.memory_space<vmem>>, %arg2: memref<8x32xf32, #tpu.memory_space<vmem>>, %arg3: memref<8x5x32xf32, #tpu.memory_space<vmem>>, %arg4: memref<8x1xf32, #tpu.memory_space<vmem>>) attributes {dimension_semantics = [#tpu.dimension_semantics<parallel>], iteration_bounds = array<i64: 1>, scalar_prefetch = 0 : i64, scratch_operands = 0 : i64, tpu.core_type = #tpu.core_type<tc>, window_params = [{transform_indices = @transform_0, window_bounds = array<i64: 8, 32>}, {transform_indices = @transform_1, window_bounds = array<i64: 8, 32>}, {transform_indices = @transform_2, window_bounds = array<i64: 8, 5, 32>}, {transform_indices = @transform_3, window_bounds = array<i64: 8, 1>}]} {
    %c0 = arith.constant 0 : index
    %c0_0 = arith.constant 0 : index
    %0 = vector.load %arg1[%c0, %c0_0] : memref<8x32xf32, #tpu.memory_space<vmem>>, vector<8x32xf32>
    %c0_1 = arith.constant 0 : index
    %c0_2 = arith.constant 0 : index
    %1 = vector.load %arg2[%c0_1, %c0_2] : memref<8x32xf32, #tpu.memory_space<vmem>>, vector<8x32xf32>
    %2 = arith.mulf %0, %0 : vector<8x32xf32>
    %cst = arith.constant dense<0.000000e+00> : vector<8xf32>
    %3 = vector.multi_reduction <add>, %2, %cst [1] : vector<8x32xf32> to vector<8xf32>
    %4 = vector.shape_cast %3 : vector<8xf32> to vector<8x1xf32>
    %cst_3 = arith.constant 1.000000e-24 : f32
    %5 = vector.broadcast %cst_3 : f32 to vector<8x1xf32>
    %6 = arith.maximumf %4, %5 : vector<8x1xf32>
    %7 = math.rsqrt %6 : vector<8x1xf32>
    %8 = vector.broadcast %7 : vector<8x1xf32> to vector<8x32xf32>
    %9 = arith.mulf %0, %8 : vector<8x32xf32>
    %10 = arith.mulf %1, %1 : vector<8x32xf32>
    %cst_4 = arith.constant dense<0.000000e+00> : vector<8xf32>
    %11 = vector.multi_reduction <add>, %10, %cst_4 [1] : vector<8x32xf32> to vector<8xf32>
    %12 = vector.shape_cast %11 : vector<8xf32> to vector<8x1xf32>
    %cst_5 = arith.constant 1.000000e-24 : f32
    %13 = vector.broadcast %cst_5 : f32 to vector<8x1xf32>
    %14 = arith.maximumf %12, %13 : vector<8x1xf32>
    %15 = math.rsqrt %14 : vector<8x1xf32>
    %16 = vector.broadcast %15 : vector<8x1xf32> to vector<8x32xf32>
    %17 = arith.mulf %1, %16 : vector<8x32xf32>
    %18 = arith.mulf %9, %17 : vector<8x32xf32>
    %cst_6 = arith.constant dense<0.000000e+00> : vector<8xf32>
    %19 = vector.multi_reduction <add>, %18, %cst_6 [1] : vector<8x32xf32> to vector<8xf32>
    %20 = vector.shape_cast %19 : vector<8xf32> to vector<8x1xf32>
    %c0_7 = arith.constant 0 : index
    %c0_8 = arith.constant 0 : index
    %c0_9 = arith.constant 0 : index
    %21 = vector.load %arg3[%c0_7, %c0_8, %c0_9] : memref<8x5x32xf32, #tpu.memory_space<vmem>>, vector<8x5x32xf32>
    %22 = vector.shape_cast %9 : vector<8x32xf32> to vector<8x1x32xf32>
    %23 = vector.broadcast %22 : vector<8x1x32xf32> to vector<8x5x32xf32>
    %24 = arith.mulf %23, %21 : vector<8x5x32xf32>
    %cst_10 = arith.constant dense<0.000000e+00> : vector<8x5xf32>
    %25 = vector.multi_reduction <add>, %24, %cst_10 [2] : vector<8x5x32xf32> to vector<8x5xf32>
    %26 = arith.mulf %21, %21 : vector<8x5x32xf32>
    %cst_11 = arith.constant dense<0.000000e+00> : vector<8x5xf32>
    %27 = vector.multi_reduction <add>, %26, %cst_11 [2] : vector<8x5x32xf32> to vector<8x5xf32>
    %cst_12 = arith.constant 1.000000e-24 : f32
    %28 = vector.broadcast %cst_12 : f32 to vector<8x5xf32>
    %29 = arith.maximumf %27, %28 : vector<8x5xf32>
    %30 = math.rsqrt %29 : vector<8x5xf32>
    %31 = arith.mulf %25, %30 : vector<8x5xf32>
    %cst_13 = arith.constant 2.000000e+00 : f32
    %32 = vector.broadcast %cst_13 : f32 to vector<8x1xf32>
    %33 = arith.mulf %20, %32 : vector<8x1xf32>
    %cst_14 = arith.constant 2.000000e+00 : f32
    %34 = vector.broadcast %cst_14 : f32 to vector<8x5xf32>
    %35 = arith.mulf %31, %34 : vector<8x5xf32>
    %cst_15 = arith.constant dense<0xFF800000> : vector<8xf32>
    %36 = vector.multi_reduction <maximumf>, %35, %cst_15 [1] : vector<8x5xf32> to vector<8xf32>
    %37 = vector.shape_cast %36 : vector<8xf32> to vector<8x1xf32>
    %38 = arith.maximumf %33, %37 : vector<8x1xf32>
    %39 = arith.subf %33, %38 : vector<8x1xf32>
    %40 = math.exp %39 : vector<8x1xf32>
    %41 = vector.broadcast %38 : vector<8x1xf32> to vector<8x5xf32>
    %42 = arith.subf %35, %41 : vector<8x5xf32>
    %43 = math.exp %42 : vector<8x5xf32>
    %cst_16 = arith.constant dense<0.000000e+00> : vector<8xf32>
    %44 = vector.multi_reduction <add>, %43, %cst_16 [1] : vector<8x5xf32> to vector<8xf32>
    %45 = vector.shape_cast %44 : vector<8xf32> to vector<8x1xf32>
    %46 = arith.addf %40, %45 : vector<8x1xf32>
    %47 = math.log %46 : vector<8x1xf32>
    %48 = arith.addf %38, %47 : vector<8x1xf32>
    %49 = arith.subf %48, %33 : vector<8x1xf32>
    %c0_17 = arith.constant 0 : index
    %c0_18 = arith.constant 0 : index
    %50 = vector.load %arg4[%c0_17, %c0_18] : memref<8x1xf32, #tpu.memory_space<vmem>>, vector<8x1xf32>
    tpu.vector_store %arg4[%c0_17, %c0_18], %49 {strides = array<i32>} : memref<8x1xf32, #tpu.memory_space<vmem>>, vector<8x1xf32>,
    return
  }
  func.func @transform_0(%arg0: i32) -> (i32, i32) {
    %c0_i32 = arith.constant 0 : i32
    %c0_i32_0 = arith.constant 0 : i32
    return %arg0, %c0_i32 : i32, i32
  }
  func.func @transform_1(%arg0: i32) -> (i32, i32) {
    %c0_i32 = arith.constant 0 : i32
    %c0_i32_0 = arith.constant 0 : i32
    return %arg0, %c0_i32 : i32, i32
  }
  func.func @transform_2(%arg0: i32) -> (i32, i32, i32) {
    %c0_i32 = arith.constant 0 : i32
    %c0_i32_0 = arith.constant 0 : i32
    %c0_i32_1 = arith.constant 0 : i32
    return %arg0, %c0_i32, %c0_i32_0 : i32, i32, i32
  }
  func.func @transform_3(%arg0: i32) -> (i32, i32) {
    %c0_i32 = arith.constant 0 : i32
    %c0_i32_0 = arith.constant 0 : i32
    return %arg0, %c0_i32 : i32, i32
  }
}

</mosaic_0001>

<llo_original>
// kernel: tpu_custom_call.1
$region0: #{tpu_custom_call.1}
  #allocation0 [shape = 'u32[]', space=smem, size = 0x4, offset = 0x4, fixed_abs, tag = 'smem constant byte address 0x4 - core index']
  #allocation1 [shape = 'u32[144,128]{1,0:T(1,128)}', space=vmem, size = 0x12000, scoped, tag = 'internal scratch']
  %s0 = inlined_call_operand.vmem [shape: f32[8,32], index: 0, kind: input, shape index: {}]
  %s1 = inlined_call_operand.vmem [shape: f32[8,32], index: 1, kind: input, shape index: {}]
  %s2 = inlined_call_operand.vmem [shape: f32[8,5,32], index: 2, kind: input, shape index: {}]
  %s3 = inlined_call_operand.vmem [shape: f32[8,1], index: 3, kind: output, shape index: {}]
  %s4 = sld [smem:[#allocation0]]
  $region22: #{tpu_custom_call.1} parent=0
    _
  %s6 = ssub.s32 1, %s4
  %s7 = scalar_select 0, %s6, %s4
  // Predicated region
  $region2: #{tpu_custom_call.1} parent=0 // pred_check
    _
  $region3: #{tpu_custom_call.1} parent=0 // pred_check_branch
    %9 = sbr.rel (0) target = $region5
  $region4: #{tpu_custom_call.1} parent=0 // pred_region
    _
  $region5: #{tpu_custom_call.1} parent=0 // pred_fallthru
    _
  // Predicated region
  $region6: #{tpu_custom_call.1} parent=0 // pred_check
    _
  $region7: #{tpu_custom_call.1} parent=0 // pred_check_branch
    %11 = sbr.rel (0) target = $region9
  $region8: #{tpu_custom_call.1} parent=0 // pred_region
    _
  $region9: #{tpu_custom_call.1} parent=0 // pred_fallthru
    _
  // Predicated region
  $region10: #{tpu_custom_call.1} parent=0 // pred_check
    _
  $region11: #{tpu_custom_call.1} parent=0 // pred_check_branch
    %13 = sbr.rel (0) target = $region13
  $region12: #{tpu_custom_call.1} parent=0 // pred_region
    _
  $region13: #{tpu_custom_call.1} parent=0 // pred_fallthru
    _
  %v14 = vld [vmem:[%s0] sm:$0xff]
  %v15 = vld [vmem:[%s1] sm:$0xff]
  %v16 = vmul.f32 %v14, %v14
  %vm17 = vcmask 261120
  %v18 = vsel %vm17, %v16, 0.0
  %19 = vadd.xlane.f32.xlu0 %v18
  %v20 = vpop.xlane.xlu0 %19
  %v21 = vmax.f32 %v20, 1e-24
  %v22 = vrsqrt.pop %v21
  %v23 = vmul.f32 %v14, %v22
  %v24 = vmul.f32 %v15, %v15
  %v25 = vsel %vm17, %v24, 0.0
  %26 = vadd.xlane.f32.xlu0 %v25
  %v27 = vpop.xlane.xlu0 %26
  %v28 = vmax.f32 %v27, 1e-24
  %v29 = vrsqrt.pop %v28
  %v30 = vmul.f32 %v15, %v29
  %v31 = vmul.f32 %v23, %v30
  %v32 = vsel %vm17, %v31, 0.0
  %33 = vadd.xlane.f32.xlu0 %v32
  %v34 = vpop.xlane.xlu0 %33
  %v35 = vld [vmem:[%s2] sm:$0x1f]
  %v36 = vld [vmem:[%s2 + $0x8] sm:$0x1f]
  %v37 = vld [vmem:[%s2 + $0x10] sm:$0x1f]
  %v38 = vld [vmem:[%s2 + $0x18] sm:$0x1f]
  %v39 = vld [vmem:[%s2 + $0x20] sm:$0x1f]
  %v40 = vld [vmem:[%s2 + $0x28] sm:$0x1f]
  %v41 = vld [vmem:[%s2 + $0x30] sm:$0x1f]
  %v42 = vld [vmem:[%s2 + $0x38] sm:$0x1f]
  %v44 = vcombine.high %v23, %v23
  %v46 = vunpack.c.l.s4 1966171168
  %v47 = vunpack.c.0.s8 %v46
  %v48 = vlaneseq
  %v49 = vshrl.u32 %v48, 7
  %v50 = vsub.s32 %v47, %v49
  %v51 = vrot.slane %v23, %v50
  %v53 = vunpack.c.l.s4 1966171168
  %v54 = vunpack.c.0.s8 %v53
  %v55 = vlaneseq
  %v56 = vshrl.u32 %v55, 7
  %v57 = vsub.s32 %v54, %v56
  %v58 = vrot.slane %v44, %v57
  %v59 = vcombine.high %v51, %v51
  %v60 = vcombine.high %v58, %v58
  %v62 = vunpack.c.l.s4 1966171168
  %v63 = vunpack.c.0.s8 %v62
  %v64 = vlaneseq
  %v65 = vshrl.u32 %v64, 7
  %v66 = vsub.s32 %v63, %v65
  %v67 = vrot.slane %v51, %v66
  %v69 = vunpack.c.l.s4 1966171168
  %v70 = vunpack.c.0.s8 %v69
  %v71 = vlaneseq
  %v72 = vshrl.u32 %v71, 7
  %v73 = vsub.s32 %v70, %v72
  %v74 = vrot.slane %v58, %v73
  %v76 = vunpack.c.l.s4 1966171168
  %v77 = vunpack.c.0.s8 %v76
  %v78 = vlaneseq
  %v79 = vshrl.u32 %v78, 7
  %v80 = vsub.s32 %v77, %v79
  %v81 = vrot.slane %v59, %v80
  %v83 = vunpack.c.l.s4 1966171168
  %v84 = vunpack.c.0.s8 %v83
  %v85 = vlaneseq
  %v86 = vshrl.u32 %v85, 7
  %v87 = vsub.s32 %v84, %v86
  %v88 = vrot.slane %v60, %v87
  %v89 = vcombine.high %v67, %v67
  %v90 = vcombine.high %v74, %v74
  %v91 = vcombine.high %v81, %v81
  %v92 = vcombine.high %v88, %v88
  %v93 = vlaneseq
  %v94 = vshrl.u32 %v93, 7
  %v95 = vsub.s32 0, %v94
  %v96 = vrot.slane %v67, %v95
  %v97 = vlaneseq
  %v98 = vshrl.u32 %v97, 7
  %v99 = vsub.s32 0, %v98
  %v100 = vrot.slane %v81, %v99
  %v101 = vlaneseq
  %v102 = vshrl.u32 %v101, 7
  %v103 = vsub.s32 0, %v102
  %v104 = vrot.slane %v89, %v103
  %v105 = vlaneseq
  %v106 = vshrl.u32 %v105, 7
  %v107 = vsub.s32 0, %v106
  %v108 = vrot.slane %v91, %v107
  %v109 = vlaneseq
  %v110 = vshrl.u32 %v109, 7
  %v111 = vsub.s32 0, %v110
  %v112 = vrot.slane %v74, %v111
  %v113 = vlaneseq
  %v114 = vshrl.u32 %v113, 7
  %v115 = vsub.s32 0, %v114
  %v116 = vrot.slane %v88, %v115
  %v117 = vlaneseq
  %v118 = vshrl.u32 %v117, 7
  %v119 = vsub.s32 0, %v118
  %v120 = vrot.slane %v90, %v119
  %v121 = vlaneseq
  %v122 = vshrl.u32 %v121, 7
  %v123 = vsub.s32 0, %v122
  %v124 = vrot.slane %v92, %v123
  %v133 = vmul.f32 %v96, %v35
  %v134 = vmul.f32 %v100, %v36
  %v135 = vmul.f32 %v104, %v37
  %v136 = vmul.f32 %v108, %v38
  %v137 = vmul.f32 %v112, %v39
  %v138 = vmul.f32 %v116, %v40
  %v139 = vmul.f32 %v120, %v41
  %v140 = vmul.f32 %v124, %v42
  %vm141 = vcmask 258048
  %v142 = vsel %vm141, %v133, 0.0
  %143 = vadd.xlane.f32.xlu0 %v142
  %v144 = vpop.xlane.xlu0 %143
  %v145 = vsel %vm141, %v134, 0.0
  %146 = vadd.xlane.f32.xlu0 %v145
  %v147 = vpop.xlane.xlu0 %146
  %v148 = vsel %vm141, %v135, 0.0
  %149 = vadd.xlane.f32.xlu0 %v148
  %v150 = vpop.xlane.xlu0 %149
  %v151 = vsel %vm141, %v136, 0.0
  %152 = vadd.xlane.f32.xlu0 %v151
  %v153 = vpop.xlane.xlu0 %152
  %v154 = vsel %vm141, %v137, 0.0
  %155 = vadd.xlane.f32.xlu0 %v154
  %v156 = vpop.xlane.xlu0 %155
  %v157 = vsel %vm141, %v138, 0.0
  %158 = vadd.xlane.f32.xlu0 %v157
  %v159 = vpop.xlane.xlu0 %158
  %v160 = vsel %vm141, %v139, 0.0
  %161 = vadd.xlane.f32.xlu0 %v160
  %v162 = vpop.xlane.xlu0 %161
  %v163 = vsel %vm141, %v140, 0.0
  %164 = vadd.xlane.f32.xlu0 %v163
  %v165 = vpop.xlane.xlu0 %164
  %v166 = vmul.f32 %v35, %v35
  %v167 = vmul.f32 %v36, %v36
  %v168 = vmul.f32 %v37, %v37
  %v169 = vmul.f32 %v38, %v38
  %v170 = vmul.f32 %v39, %v39
  %v171 = vmul.f32 %v40, %v40
  %v172 = vmul.f32 %v41, %v41
  %v173 = vmul.f32 %v42, %v42
  %v174 = vsel %vm141, %v166, 0.0
  %175 = vadd.xlane.f32.xlu0 %v174
  %v176 = vpop.xlane.xlu0 %175
  %v177 = vsel %vm141, %v167, 0.0
  %178 = vadd.xlane.f32.xlu0 %v177
  %v179 = vpop.xlane.xlu0 %178
  %v180 = vsel %vm141, %v168, 0.0
  %181 = vadd.xlane.f32.xlu0 %v180
  %v182 = vpop.xlane.xlu0 %181
  %v183 = vsel %vm141, %v169, 0.0
  %184 = vadd.xlane.f32.xlu0 %v183
  %v185 = vpop.xlane.xlu0 %184
  %v186 = vsel %vm141, %v170, 0.0
  %187 = vadd.xlane.f32.xlu0 %v186
  %v188 = vpop.xlane.xlu0 %187
  %v189 = vsel %vm141, %v171, 0.0
  %190 = vadd.xlane.f32.xlu0 %v189
  %v191 = vpop.xlane.xlu0 %190
  %v192 = vsel %vm141, %v172, 0.0
  %193 = vadd.xlane.f32.xlu0 %v192
  %v194 = vpop.xlane.xlu0 %193
  %v195 = vsel %vm141, %v173, 0.0
  %196 = vadd.xlane.f32.xlu0 %v195
  %v197 = vpop.xlane.xlu0 %196
  %v198 = vmax.f32 %v176, 1e-24
  %v199 = vmax.f32 %v179, 1e-24
  %v200 = vmax.f32 %v182, 1e-24
  %v201 = vmax.f32 %v185, 1e-24
  %v202 = vmax.f32 %v188, 1e-24
  %v203 = vmax.f32 %v191, 1e-24
  %v204 = vmax.f32 %v194, 1e-24
  %v205 = vmax.f32 %v197, 1e-24
  %v206 = vrsqrt.pop %v198
  %v207 = vrsqrt.pop %v199
  %v208 = vrsqrt.pop %v200
  %v209 = vrsqrt.pop %v201
  %v210 = vrsqrt.pop %v202
  %v211 = vrsqrt.pop %v203
  %v212 = vrsqrt.pop %v204
  %v213 = vrsqrt.pop %v205
  %v214 = vmul.f32 %v144, %v206
  %v215 = vmul.f32 %v147, %v207
  %v216 = vmul.f32 %v150, %v208
  %v217 = vmul.f32 %v153, %v209
  %v218 = vmul.f32 %v156, %v210
  %v219 = vmul.f32 %v159, %v211
  %v220 = vmul.f32 %v162, %v212
  %v221 = vmul.f32 %v165, %v213
  %v222 = vmul.f32 %v34, 2.0
  %v223 = vmul.f32 %v214, 2.0
  %v224 = vmul.f32 %v215, 2.0
  %v225 = vmul.f32 %v216, 2.0
  %v226 = vmul.f32 %v217, 2.0
  %v227 = vmul.f32 %v218, 2.0
  %v228 = vmul.f32 %v219, 2.0
  %v229 = vmul.f32 %v220, 2.0
  %v230 = vmul.f32 %v221, 2.0
  %v239 = vlaneseq
  %v240 = vand.u32 %v239, 127
  %v241 = vlaneseq
  %v242 = vshrl.u32 %v241, 7
  %v243 = vsub.s32 %v240, %v242
  %v244 = vrot.slane %v223, %v243
  %v245 = vlaneseq
  %v246 = vshrl.u32 %v245, 7
  %v247 = vsub.s32 %v240, %v246
  %v248 = vrot.slane %v224, %v247
  %v249 = vlaneseq
  %v250 = vshrl.u32 %v249, 7
  %v251 = vsub.s32 %v240, %v250
  %v252 = vrot.slane %v225, %v251
  %v253 = vlaneseq
  %v254 = vshrl.u32 %v253, 7
  %v255 = vsub.s32 %v240, %v254
  %v256 = vrot.slane %v226, %v255
  %v257 = vlaneseq
  %v258 = vshrl.u32 %v257, 7
  %v259 = vsub.s32 %v240, %v258
  %v260 = vrot.slane %v227, %v259
  %v261 = vlaneseq
  %v262 = vshrl.u32 %v261, 7
  %v263 = vsub.s32 %v240, %v262
  %v264 = vrot.slane %v228, %v263
  %v265 = vlaneseq
  %v266 = vshrl.u32 %v265, 7
  %v267 = vsub.s32 %v240, %v266
  %v268 = vrot.slane %v229, %v267
  %v269 = vlaneseq
  %v270 = vshrl.u32 %v269, 7
  %v271 = vsub.s32 %v240, %v270
  %v272 = vrot.slane %v230, %v271
  %vm273 = vcmask 1041409
  %v274 = vsel %vm273, %v248, %v244
  %vm275 = vcmask 1042434
  %v276 = vsel %vm275, %v252, %v274
  %vm277 = vcmask 1043459
  %v278 = vsel %vm277, %v256, %v276
  %vm279 = vcmask 1044484
  %v280 = vsel %vm279, %v260, %v278
  %vm281 = vcmask 1045509
  %v282 = vsel %vm281, %v264, %v280
  %vm283 = vcmask 1046534
  %v284 = vsel %vm283, %v268, %v282
  %vm285 = vcmask 1047559
  %v286 = vsel %vm285, %v272, %v284
  %vm288 = vcmask 39936
  %v289 = vsel %vm288, %v286, -inf
  %290 = vmax.xlane.f32.xlu0 %v289
  %v291 = vpop.xlane.xlu0 %290
  %v292 = vmax.f32 %v222, %v291
  %v293 = vsub.f32 %v222, %v292
  %v294 = vmul.f32 %v293, 1.442695
  %v295 = vpow.pop %v294
  %v297 = vlaneseq
  %v298 = vshrl.u32 %v297, 7
  %v299 = vsub.s32 0, %v298
  %v300 = vrot.slane %v292, %v299
  %v301 = vlaneseq
  %v302 = vshrl.u32 %v301, 7
  %v303 = vsub.s32 1, %v302
  %v304 = vrot.slane %v292, %v303
  %v305 = vlaneseq
  %v306 = vshrl.u32 %v305, 7
  %v307 = vsub.s32 2, %v306
  %v308 = vrot.slane %v292, %v307
  %v309 = vlaneseq
  %v310 = vshrl.u32 %v309, 7
  %v311 = vsub.s32 3, %v310
  %v312 = vrot.slane %v292, %v311
  %v313 = vlaneseq
  %v314 = vshrl.u32 %v313, 7
  %v315 = vsub.s32 4, %v314
  %v316 = vrot.slane %v292, %v315
  %v317 = vlaneseq
  %v318 = vshrl.u32 %v317, 7
  %v319 = vsub.s32 5, %v318
  %v320 = vrot.slane %v292, %v319
  %v321 = vlaneseq
  %v322 = vshrl.u32 %v321, 7
  %v323 = vsub.s32 6, %v322
  %v324 = vrot.slane %v292, %v323
  %v325 = vlaneseq
  %v326 = vshrl.u32 %v325, 7
  %v327 = vsub.s32 7, %v326
  %v328 = vrot.slane %v292, %v327
  %v337 = vsub.f32 %v223, %v300
  %v338 = vsub.f32 %v224, %v304
  %v339 = vsub.f32 %v225, %v308
  %v340 = vsub.f32 %v226, %v312
  %v341 = vsub.f32 %v227, %v316
  %v342 = vsub.f32 %v228, %v320
  %v343 = vsub.f32 %v229, %v324
  %v344 = vsub.f32 %v230, %v328
  %v345 = vmul.f32 %v337, 1.442695
  %v346 = vpow.pop %v345
  %v347 = vmul.f32 %v338, 1.442695
  %v348 = vpow.pop %v347
  %v349 = vmul.f32 %v339, 1.442695
  %v350 = vpow.pop %v349
  %v351 = vmul.f32 %v340, 1.442695
  %v352 = vpow.pop %v351
  %v353 = vmul.f32 %v341, 1.442695
  %v354 = vpow.pop %v353
  %v355 = vmul.f32 %v342, 1.442695
  %v356 = vpow.pop %v355
  %v357 = vmul.f32 %v343, 1.442695
  %v358 = vpow.pop %v357
  %v359 = vmul.f32 %v344, 1.442695
  %v360 = vpow.pop %v359
  %369 = vset.pattern.permute.xlu0 0
  %370 = vperm.xlu0 %369, %v346
  %v371 = vpop.permute.xlu0 %370
  %372 = vset.pattern.permute.xlu0 0
  %373 = vperm.xlu0 %372, %v348
  %v374 = vpop.permute.xlu0 %373
  %375 = vset.pattern.permute.xlu0 0
  %376 = vperm.xlu0 %375, %v350
  %v377 = vpop.permute.xlu0 %376
  %378 = vset.pattern.permute.xlu0 0
  %379 = vperm.xlu0 %378, %v352
  %v380 = vpop.permute.xlu0 %379
  %381 = vset.pattern.permute.xlu0 0
  %382 = vperm.xlu0 %381, %v354
  %v383 = vpop.permute.xlu0 %382
  %384 = vset.pattern.permute.xlu0 0
  %385 = vperm.xlu0 %384, %v356
  %v386 = vpop.permute.xlu0 %385
  %387 = vset.pattern.permute.xlu0 0
  %388 = vperm.xlu0 %387, %v358
  %v389 = vpop.permute.xlu0 %388
  %390 = vset.pattern.permute.xlu0 0
  %391 = vperm.xlu0 %390, %v360
  %v392 = vpop.permute.xlu0 %391
  %v393 = vlaneseq
  %v394 = vshrl.u32 %v393, 7
  %v395 = vsub.s32 %v240, %v394
  %v396 = vrot.slane %v371, %v395
  %v397 = vlaneseq
  %v398 = vshrl.u32 %v397, 7
  %v399 = vsub.s32 %v240, %v398
  %v400 = vrot.slane %v374, %v399
  %v401 = vlaneseq
  %v402 = vshrl.u32 %v401, 7
  %v403 = vsub.s32 %v240, %v402
  %v404 = vrot.slane %v377, %v403
  %v405 = vlaneseq
  %v406 = vshrl.u32 %v405, 7
  %v407 = vsub.s32 %v240, %v406
  %v408 = vrot.slane %v380, %v407
  %v409 = vlaneseq
  %v410 = vshrl.u32 %v409, 7
  %v411 = vsub.s32 %v240, %v410
  %v412 = vrot.slane %v383, %v411
  %v413 = vlaneseq
  %v414 = vshrl.u32 %v413, 7
  %v415 = vsub.s32 %v240, %v414
  %v416 = vrot.slane %v386, %v415
  %v417 = vlaneseq
  %v418 = vshrl.u32 %v417, 7
  %v419 = vsub.s32 %v240, %v418
  %v420 = vrot.slane %v389, %v419
  %v421 = vlaneseq
  %v422 = vshrl.u32 %v421, 7
  %v423 = vsub.s32 %v240, %v422
  %v424 = vrot.slane %v392, %v423
  %v425 = vsel %vm273, %v400, %v396
  %v426 = vsel %vm275, %v404, %v425
  %v427 = vsel %vm277, %v408, %v426
  %v428 = vsel %vm279, %v412, %v427
  %v429 = vsel %vm281, %v416, %v428
  %v430 = vsel %vm283, %v420, %v429
  %v431 = vsel %vm285, %v424, %v430
  %v433 = vsel %vm288, %v431, 0.0
  %434 = vadd.xlane.f32.xlu0 %v433
  %v435 = vpop.xlane.xlu0 %434
  %v436 = vadd.f32 %v295, %v435
  %v437 = vlog2.pop %v436
  %v438 = vmul.f32 %v437, 0.6931472
  %v439 = vadd.f32 %v292, %v438
  %v440 = vsub.f32 %v439, %v222
  %vm441 = vcmask 7168
  %442 = vst.msk [vmem:[%s3] sm:$0xff] %vm441, %v440
  // Predicated region
  $region14: #{tpu_custom_call.1} parent=0 // pred_check
    _
  $region15: #{tpu_custom_call.1} parent=0 // pred_check_branch
    %444 = sbr.rel (0) target = $region17
  $region16: #{tpu_custom_call.1} parent=0 // pred_region
    _
  $region17: #{tpu_custom_call.1} parent=0 // pred_fallthru
    _
  // Predicated region
  $region18: #{tpu_custom_call.1} parent=0 // pred_check
    _
  $region19: #{tpu_custom_call.1} parent=0 // pred_check_branch
    %446 = sbr.rel (0) target = $region21
  $region20: #{tpu_custom_call.1} parent=0 // pred_region
    _
  $region21: #{tpu_custom_call.1} parent=0 // pred_fallthru
    _

</llo_original>
